<compile_context>
chip_gen: v6e
topology: v6e:2x2x1
jax: 0.10.0
libtpu: 0.0.40
codegen_flags: <defaults>
</compile_context>

<pallas_src>
import jax
import jax.numpy as jnp
from jax.experimental import pallas as pl
from jax.experimental.pallas import tpu as pltpu

NEG_SLOPE = 0.01  # nn.LeakyReLU default slope


def _round_up(n, m):
    return ((n + m - 1) // m) * m


def _leaky_relu(x):
    # For 0 < slope < 1 this equals where(x > 0, x, slope * x) exactly,
    # but lowers to a single vmax on the VPU.
    return jnp.maximum(x, NEG_SLOPE * x)


def recover_kernel(x_ref, w1_ref, w2_ref, o_ref):
    # Fused 2-layer MLP; intermediates stay in vregs/VMEM.
    # x arrives in its HBM dtype (f32); cast to the weight dtype on the VPU.
    x = x_ref[...].astype(w1_ref.dtype)
    h = jnp.dot(x, w1_ref[...], preferred_element_type=jnp.float32)
    h = _leaky_relu(h)
    h = h.astype(w2_ref.dtype)  # bf16 for the second MXU pass
    out = jnp.dot(h, w2_ref[...], preferred_element_type=jnp.float32)
    o_ref[...] = out.astype(o_ref.dtype)


def _weight_spec(shape):
    # Weight blocks are grid-invariant -> single-buffer them (halves their
    # VMEM footprint; matters most on v7x's 64 MiB VMEM).
    try:
        return pl.BlockSpec(shape, lambda i: (0, 0), pipeline_mode=pl.Buffered(1))
    except (AttributeError, TypeError):
        return pl.BlockSpec(shape, lambda i: (0, 0))


def prepare_weights(w1, w2, compute_dtype=jnp.bfloat16):
    """One-time (init-path) weight prep: pad to lane-dense dims, cast to bf16.

    w1: (mid_dim, 200)  == PyTorch decoder[0].weight.T
    w2: (200, recover_dim) == PyTorch decoder[2].weight.T
    Zero-padding is exact: padded hidden columns give 0 activations
    (leaky_relu(0)=0) and padded w2 rows/cols contribute nothing.
    """
    hidden = w1.shape[1]
    recover_dim = w2.shape[1]
    assert w2.shape[0] == hidden
    hidden_p = _round_up(hidden, 128)
    rec_p = _round_up(recover_dim, 128)
    if hidden_p != hidden:
        w1 = jnp.pad(w1, ((0, 0), (0, hidden_p - hidden)))
        w2 = jnp.pad(w2, ((0, hidden_p - hidden), (0, 0)))
    if rec_p != recover_dim:
        w2 = jnp.pad(w2, ((0, 0), (0, rec_p - recover_dim)))
    return w1.astype(compute_dtype), w2.astype(compute_dtype), recover_dim


def _pick_tile_b(B, max_tile=1024, min_steps=2):
    # Big batch tiles (per-step overhead ~0.35 us; 512-1024 hits ~85% of HBM
    # roofline), but keep >= min_steps grid steps so the 'parallel' batch axis
    # can be sharded across v7x's 2 TensorCores. Multiple-of-16 rows keeps
    # packed bf16/f32 sublane layouts unmasked (v5e-friendly).
    tile = _round_up(max(1, -(-B // min_steps)), 16)
    return max(16, min(max_tile, tile))


def recover_forward(x, w1p, w2p, recover_dim, *, tile_b=None,
                    out_dtype=jnp.float32):
    """x: [B, mid_dim] (any float dtype, typically f32).
    w1p/w2p: outputs of prepare_weights(). Returns [B, recover_dim]."""
    B, mid_dim = x.shape
    hidden_p = w1p.shape[1]
    rec_p = w2p.shape[1]
    assert w2p.shape[0] == hidden_p

    if tile_b is None:
        tile_b = _pick_tile_b(B)
    grid = (pl.cdiv(B, tile_b),)  # ragged last block handled by Pallas masking

    cost = pl.CostEstimate(
        flops=2 * B * (mid_dim * hidden_p + hidden_p * rec_p),
        transcendentals=0,
        bytes_accessed=(x.size * x.dtype.itemsize
                        + w1p.size * w1p.dtype.itemsize
                        + w2p.size * w2p.dtype.itemsize
                        + B * rec_p * jnp.dtype(out_dtype).itemsize),
    )

    out = pl.pallas_call(
        recover_kernel,
        out_shape=jax.ShapeDtypeStruct((B, rec_p), out_dtype),
        grid_spec=pltpu.PrefetchScalarGridSpec(
            num_scalar_prefetch=0,
            grid=grid,
            in_specs=[
                pl.BlockSpec((tile_b, mid_dim), lambda i: (i, 0)),
                _weight_spec((mid_dim, hidden_p)),
                _weight_spec((hidden_p, rec_p)),
            ],
            out_specs=pl.BlockSpec((tile_b, rec_p), lambda i: (i, 0)),
        ),
        compiler_params=pltpu.CompilerParams(
            dimension_semantics=("parallel",),
        ),
        cost_estimate=cost,
    )(x, w1p, w2p)

    if rec_p != recover_dim:
        out = out[:, :recover_dim]
    return out


def reference_forward(x, w1, w2, compute_dtype=jnp.bfloat16):
    # Pure-JAX reference with the same bf16 casts as the kernel, f32 math.
    xc = x.astype(compute_dtype).astype(jnp.float32)
    w1c = w1.astype(compute_dtype).astype(jnp.float32)
    w2c = w2.astype(compute_dtype).astype(jnp.float32)
    h = xc @ w1c
    h = jnp.maximum(h, NEG_SLOPE * h)
    h = h.astype(compute_dtype).astype(jnp.float32)
    return h @ w2c


if __name__ == "__main__":
    # Small shapes consistent with the module (hidden dim is the fixed 200).
    # B=100 deliberately exercises the ragged last batch block; recover_dim=48
    # exercises lane padding of the output dim.
    B, MID_DIM, RECOVER_DIM = 100, 32, 48

    key = jax.random.PRNGKey(0)
    kx, k1, k2 = jax.random.split(key, 3)

    x = jax.random.normal(kx, (B, MID_DIM), dtype=jnp.float32)
    # Weights stored as (in, out), i.e. the transpose of PyTorch Linear weights.
    w1 = jax.random.normal(k1, (MID_DIM, 200), dtype=jnp.float32) * 0.05
    w2 = jax.random.normal(k2, (200, RECOVER_DIM), dtype=jnp.float32) * 0.05

    # One-time weight prep (hoisted out of the per-forward path).
    w1p, w2p, rec_dim = prepare_weights(w1, w2)

    out = recover_forward(x, w1p, w2p, rec_dim)
    out = jax.block_until_ready(out)

    ref = reference_forward(x, w1, w2)
    assert out.shape == (B, RECOVER_DIM)
    assert jnp.allclose(out, ref, atol=2e-2, rtol=2e-2), "mismatch vs reference"

    print("KERNEL_OK")
</pallas_src>

<mosaic_0001>
module attributes {stable_mosaic.version = 11 : i64} {
  func.func @recover_kernel(%arg0: i32, %arg1: memref<64x32xf32, #tpu.memory_space<vmem>>, %arg2: memref<32x256xbf16, #tpu.memory_space<vmem>>, %arg3: memref<256x128xbf16, #tpu.memory_space<vmem>>, %arg4: memref<64x128xf32, #tpu.memory_space<vmem>>) attributes {dimension_semantics = [#tpu.dimension_semantics<parallel>], iteration_bounds = array<i64: 2>, scalar_prefetch = 0 : i64, scratch_operands = 0 : i64, tpu.core_type = #tpu.core_type<tc>, window_params = [{transform_indices = @transform_0, window_bounds = array<i64: 64, 32>}, {pipeline_mode = #tpu.pipeline_mode<synchronous>, transform_indices = @transform_1, window_bounds = array<i64: 32, 256>}, {pipeline_mode = #tpu.pipeline_mode<synchronous>, transform_indices = @transform_2, window_bounds = array<i64: 256, 128>}, {transform_indices = @transform_3, window_bounds = array<i64: 64, 128>}]} {
    %c0 = arith.constant 0 : index
    %c0_0 = arith.constant 0 : index
    %0 = vector.load %arg1[%c0, %c0_0] : memref<64x32xf32, #tpu.memory_space<vmem>>, vector<64x32xf32>
    %1 = arith.truncf %0 : vector<64x32xf32> to vector<64x32xbf16>
    %c0_1 = arith.constant 0 : index
    %c0_2 = arith.constant 0 : index
    %2 = vector.load %arg2[%c0_1, %c0_2] : memref<32x256xbf16, #tpu.memory_space<vmem>>, vector<32x256xbf16>
    %cst = arith.constant dense<0.000000e+00> : vector<64x256xf32>
    %3 = tpu.matmul %1, %2, %cst {dimension_numbers = #tpu.dot_dimension_numbers<[1], [0], [0], [1], [0, 0, 1, 1], [], []>} : vector<64x32xbf16>, vector<32x256xbf16>, vector<64x256xf32> -> vector<64x256xf32>
    %cst_3 = arith.constant 0.00999999977 : f32
    %4 = vector.broadcast %cst_3 : f32 to vector<64x256xf32>
    %5 = arith.mulf %4, %3 : vector<64x256xf32>
    %6 = arith.maximumf %3, %5 : vector<64x256xf32>
    %7 = arith.truncf %6 : vector<64x256xf32> to vector<64x256xbf16>
    %c0_4 = arith.constant 0 : index
    %c0_5 = arith.constant 0 : index
    %8 = vector.load %arg3[%c0_4, %c0_5] : memref<256x128xbf16, #tpu.memory_space<vmem>>, vector<256x128xbf16>
    %cst_6 = arith.constant dense<0.000000e+00> : vector<64x128xf32>
    %9 = tpu.matmul %7, %8, %cst_6 {dimension_numbers = #tpu.dot_dimension_numbers<[1], [0], [0], [1], [0, 0, 1, 1], [], []>} : vector<64x256xbf16>, vector<256x128xbf16>, vector<64x128xf32> -> vector<64x128xf32>
    %c0_7 = arith.constant 0 : index
    %c0_8 = arith.constant 0 : index
    %10 = vector.load %arg4[%c0_7, %c0_8] : memref<64x128xf32, #tpu.memory_space<vmem>>, vector<64x128xf32>
    tpu.vector_store %arg4[%c0_7, %c0_8], %9 {strides = array<i32>} : memref<64x128xf32, #tpu.memory_space<vmem>>, vector<64x128xf32>,
    return
  }
  func.func @transform_0(%arg0: i32) -> (i32, i32) {
    %c0_i32 = arith.constant 0 : i32
    %c0_i32_0 = arith.constant 0 : i32
    return %arg0, %c0_i32 : i32, i32
  }
  func.func @transform_1(%arg0: i32) -> (i32, i32) {
    %c0_i32 = arith.constant 0 : i32
    %c0_i32_0 = arith.constant 0 : i32
    %c0_i32_1 = arith.constant 0 : i32
    return %c0_i32, %c0_i32_0 : i32, i32
  }
  func.func @transform_2(%arg0: i32) -> (i32, i32) {
    %c0_i32 = arith.constant 0 : i32
    %c0_i32_0 = arith.constant 0 : i32
    %c0_i32_1 = arith.constant 0 : i32
    return %c0_i32, %c0_i32_0 : i32, i32
  }
  func.func @transform_3(%arg0: i32) -> (i32, i32) {
    %c0_i32 = arith.constant 0 : i32
    %c0_i32_0 = arith.constant 0 : i32
    return %arg0, %c0_i32 : i32, i32
  }
}

</mosaic_0001>

<llo_original>
// kernel: tpu_custom_call.1
$region0: #{tpu_custom_call.1}
  #allocation0 [shape = 'u32[]', space=smem, size = 0x4, offset = 0x4, fixed_abs, tag = 'smem constant byte address 0x4 - core index']
  #allocation1 [shape = 'u32[144,128]{1,0:T(1,128)}', space=vmem, size = 0x12000, scoped, tag = 'internal scratch']
  %s0 = inlined_call_operand.vmem [shape: f32[100,32], index: 0, kind: input, shape index: {}]
  %s1 = inlined_call_operand.hbm [shape: bf16[32,256], index: 1, kind: input, shape index: {}]
  %s2 = inlined_call_operand.vmem [shape: bf16[256,128], index: 2, kind: input, shape index: {}]
  %s3 = inlined_call_operand.hbm [shape: f32[100,128], index: 3, kind: output, shape index: {}]
  %s4 = sld [smem:[#allocation0]]
  $region49: #{tpu_custom_call.1} parent=0
    _
  %s6 = ssub.s32 1, %s4
  %s7 = scalar_select 0, %s6, %s4
  $region1: #{tpu_custom_call.1} parent=0
    #allocation2 [shape = 'u8[16384]{0}', space=vmem, size = 0x4000, scoped, tag = 'input window, operand 1, single buffered']
    #allocation3 [shape = 's32[2]{0}', space=sflag, size = 0x8, scoped, tag = 'scoped memory for tpu_custom_call.1']
    #allocation4 [shape = 's32[2]{0}', space=sflag, size = 0x8, scoped, tag = 'scoped memory for tpu_custom_call.1']
    #allocation5 [shape = 'u8[65536]{0}', space=vmem, size = 0x10000, scoped, tag = 'output window, operand 0']
    %8 = vsyncpa [#allocation3], 0
    %9 = vsyncpa [#allocation4], 0
    %s10 = scalar_lea.sflag [#allocation4], 1
    %11 = vsyncpa %s10, 0
    loop: start=0, step=1, limit=4
    $region2: #{tpu_custom_call.1} parent=1 // loop_pre_header
      _
    $region3: #{tpu_custom_call.1} parent=1 // loop_header
      %s13 = sphi 0, %s17
      %p14 = scmp.ge.s32.totalorder %s13, 4
      %s23 = sphi 0, %s25
      %s26 = sphi 0, %s23
      %s27 = sphi 0, %s26
      %s43 = sphi 0, %s27
      %s47 = sphi 0, %s47
      %s49 = sphi 0, %s47
      %s50 = sphi 0, %s49
      %s64 = sphi 0, %s50
      %s68 = sphi 0, %s68
      %s70 = sphi 0, %s68
      %s71 = sphi 0, %s70
      %s85 = sphi 0, %s71
      %s91 = sphi 0, %s93
      %s94 = sphi 0, %s91
      %s95 = sphi 0, %s94
      %s111 = sphi 0, %s95
    $region4: #{tpu_custom_call.1} parent=1 // loop_header_branch
      %16 = sbr.rel (%p14) target = $region8
    $region5: #{tpu_custom_call.1} parent=1 // loop_body
      %s18 = ssub.s32 %s13, 1
      %s19 = ssub.s32 %s13, 2
      %s20 = sadd.s32 %s13, 1
      %s21 = ssub.s32 %s13, %s20
      %p22 = scmp.eq.s32.totalorder %s21, 0
      %s24 = sadd.s32 %s23, 1
      %s25 = scalar_select %p22, %s23, %s24
      %p28 = pneg %p22
      %p29 = scmp.eq.s32.totalorder %s13, 1
      %p30 = por %p28, %p29
      %p31 = scmp.ne.s32.totalorder %s23, %s26
      %p32 = scmp.eq.s32.totalorder %s13, 0
      %p33 = por %p31, %p32
      %p34 = scmp.ne.s32.totalorder %s23, %s26
      %p35 = scmp.eq.s32.totalorder %s18, 1
      %p36 = por %p34, %p35
      %p37 = scmp.ne.s32.totalorder %s26, %s27
      %p38 = scmp.eq.s32.totalorder %s18, 0
      %p39 = por %p37, %p38
      %p40 = scmp.ne.s32.totalorder %s26, %s27
      %p41 = scmp.eq.s32.totalorder %s19, 1
      %p42 = por %p40, %p41
      %p44 = scmp.ne.s32.totalorder %s27, %s43
      %p45 = scmp.eq.s32.totalorder %s19, 0
      %p46 = por %p44, %p45
      %s48 = sadd.s32 %s47, 1
      %p51 = scmp.eq.s32.totalorder %s13, 1
      %p52 = scmp.ne.s32.totalorder %s47, %s49
      %p53 = scmp.eq.s32.totalorder %s13, 0
      %p54 = por %p52, %p53
      %p55 = scmp.ne.s32.totalorder %s47, %s49
      %p56 = scmp.eq.s32.totalorder %s18, 1
      %p57 = por %p55, %p56
      %p58 = scmp.ne.s32.totalorder %s49, %s50
      %p59 = scmp.eq.s32.totalorder %s18, 0
      %p60 = por %p58, %p59
      %p61 = scmp.ne.s32.totalorder %s49, %s50
      %p62 = scmp.eq.s32.totalorder %s19, 1
      %p63 = por %p61, %p62
      %p65 = scmp.ne.s32.totalorder %s50, %s64
      %p66 = scmp.eq.s32.totalorder %s19, 0
      %p67 = por %p65, %p66
      %s69 = sadd.s32 %s68, 1
      %p72 = scmp.eq.s32.totalorder %s13, 1
      %p73 = scmp.ne.s32.totalorder %s68, %s70
      %p74 = scmp.eq.s32.totalorder %s13, 0
      %p75 = por %p73, %p74
      %p76 = scmp.ne.s32.totalorder %s68, %s70
      %p77 = scmp.eq.s32.totalorder %s18, 1
      %p78 = por %p76, %p77
      %p79 = scmp.ne.s32.totalorder %s70, %s71
      %p80 = scmp.eq.s32.totalorder %s18, 0
      %p81 = por %p79, %p80
      %p82 = scmp.ne.s32.totalorder %s70, %s71
      %p83 = scmp.eq.s32.totalorder %s19, 1
      %p84 = por %p82, %p83
      %p86 = scmp.ne.s32.totalorder %s71, %s85
      %p87 = scmp.eq.s32.totalorder %s19, 0
      %p88 = por %p86, %p87
      %s89 = ssub.s32 %s13, %s20
      %p90 = scmp.eq.s32.totalorder %s89, 0
      %s92 = sadd.s32 %s91, 1
      %s93 = scalar_select %p90, %s91, %s92
      %p96 = pneg %p90
      %p97 = scmp.eq.s32.totalorder %s13, 1
      %p98 = por %p96, %p97
      %p99 = scmp.ne.s32.totalorder %s91, %s94
      %p100 = scmp.eq.s32.totalorder %s13, 0
      %p101 = por %p99, %p100
      %p102 = scmp.ne.s32.totalorder %s91, %s94
      %p103 = scmp.eq.s32.totalorder %s18, 1
      %p104 = por %p102, %p103
      %p105 = scmp.ne.s32.totalorder %s94, %s95
      %p106 = scmp.eq.s32.totalorder %s18, 0
      %p107 = por %p105, %p106
      %p108 = scmp.ne.s32.totalorder %s94, %s95
      %p109 = scmp.eq.s32.totalorder %s19, 1
      %p110 = por %p108, %p109
      %p112 = scmp.ne.s32.totalorder %s95, %s111
      %p113 = scmp.eq.s32.totalorder %s19, 0
      %p114 = por %p112, %p113
      %p115 = scmp.le.s32.totalorder 1, %s13
      %p116 = scmp.lt.s32.totalorder %s13, 3
      %p117 = pnand %p115, %p116
      %p118 = pneg %p117
      // Predicated region
      $region9: #{tpu_custom_call.1} parent=5 // pred_check
        _
      $region10: #{tpu_custom_call.1} parent=5 // pred_check_branch
        %120 = sbr.rel (%p117) target = $region12
      $region11: #{tpu_custom_call.1} parent=5 // pred_region
        %s121 = ssub.s32 %s13, 1
        // Predicated region
        $region13: #{tpu_custom_call.1} parent=11 // pred_check
          %p122 = pneg %p60
        $region14: #{tpu_custom_call.1} parent=11 // pred_check_branch
          %124 = sbr.rel (%p122) target = $region16
        $region15: #{tpu_custom_call.1} parent=11 // pred_region
          %s126 = ssub.s32 512, 512
          %127 = vsyncadd [#allocation3], %s126
          %s128 = sshll.u32 [#allocation2], 4
          %s129 = int_to_ptr.vmem [resolvable:$true] %s128
          %134 = dma.hbm_to_vmem [thread:$0]  %s1, 512, %s129, [#allocation3], 128, 128, 8
        $region16: #{tpu_custom_call.1} parent=11 // pred_fallthru
          _
        // Predicated region
        $region17: #{tpu_custom_call.1} parent=11 // pred_check
          %p135 = pneg %p81
        $region18: #{tpu_custom_call.1} parent=11 // pred_check_branch
          %137 = sbr.rel (%p135) target = $region20
        $region19: #{tpu_custom_call.1} parent=11 // pred_region
          _
        $region20: #{tpu_custom_call.1} parent=11 // pred_fallthru
          _
      $region12: #{tpu_custom_call.1} parent=5 // pred_fallthru
        _
      %p138 = scmp.lt.s32.totalorder %s13, 2
      // Predicated region
      $region21: #{tpu_custom_call.1} parent=5 // pred_check
        %p139 = pneg %p138
      $region22: #{tpu_custom_call.1} parent=5 // pred_check_branch
        %141 = sbr.rel (%p139) target = $region24
      $region23: #{tpu_custom_call.1} parent=5 // pred_region
        // Predicated region
        $region25: #{tpu_custom_call.1} parent=23 // pred_check
          %p142 = pneg %p33
        $region26: #{tpu_custom_call.1} parent=23 // pred_check_branch
          %144 = sbr.rel (%p142) target = $region28
        $region27: #{tpu_custom_call.1} parent=23 // pred_region
          %s145 = smul.u32 8, %s13
          %s146 = ssub.s32 13, %s145
          %p147 = scmp.lt.s32.totalorder %s146, 8
          %s148 = scalar_select %p147, %s146, 8
          %s149 = smul.u32 128, %s148
          %p150 = scmp.lt.s32.totalorder %s145, 12
          %s151 = scalar_select %p150, %s145, 12
          %s152 = smul.addr %s151, 8
          %s153 = scalar_lea.vmem %s0, %s152
          %s154 = smul.u32 8, %s13
          %s155 = ssub.s32 13, %s154
          %p156 = scmp.lt.s32.totalorder %s155, 8
          %s157 = scalar_select %p156, %s155, 8
          %s158 = smul.u32 128, %s157
        $region28: #{tpu_custom_call.1} parent=23 // pred_fallthru
          _
      $region24: #{tpu_custom_call.1} parent=5 // pred_fallthru
        _
      %p159 = scmp.le.s32.totalorder 1, %s13
      %p160 = scmp.lt.s32.totalorder %s13, 3
      %p161 = pnand %p159, %p160
      %p162 = pneg %p161
      // Predicated region
      $region29: #{tpu_custom_call.1} parent=5 // pred_check
        _
      $region30: #{tpu_custom_call.1} parent=5 // pred_check_branch
        %164 = sbr.rel (%p161) target = $region32
      $region31: #{tpu_custom_call.1} parent=5 // pred_region
        %s165 = ssub.s32 %s13, 1
        // Predicated region
        $region33: #{tpu_custom_call.1} parent=31 // pred_check
          %p166 = pneg %p60
        $region34: #{tpu_custom_call.1} parent=31 // pred_check_branch
          %168 = sbr.rel (%p166) target = $region36
        $region35: #{tpu_custom_call.1} parent=31 // pred_region
          %169 = dma.done [#allocation3], 512
        $region36: #{tpu_custom_call.1} parent=31 // pred_fallthru
          _
        %s170 = smul.u32 8, %s18
        %s171 = ssub.s32 13, %s170
        %p172 = scmp.lt.s32.totalorder %s171, 8
        %s173 = scalar_select %p172, %s171, 8
        %s174 = smul.u32 128, %s173
        %p175 = scmp.lt.s32.totalorder %s170, 12
        %s176 = scalar_select %p175, %s170, 12
        %s177 = smul.addr %s176, 8
        %s178 = scalar_lea.vmem %s0, %s177
        %p179 = pneg %p39
        %p180 = pneg %p36
        %p181 = pneg %p60
        %p182 = pneg %p57
        %p183 = pneg %p81
        %p184 = pneg %p78
        %p185 = pneg %p107
        %p186 = pneg %p104
        %s187 = sand.u32 %s94, 1
        %s188 = scalar_lea.sflag [#allocation4], %s187
        %s189 = sand.u32 %s94, 1
        %s190 = smul.addr %s189, 64
        %s191 = scalar_lea.vmem [#allocation5], %s190
        %s192 = smul.u32 8, %s18
        %s193 = ssub.s32 13, %s192
        %p194 = scmp.lt.s32.totalorder %s193, 8
        %s195 = scalar_select %p194, %s193, 8
        %s196 = smul.u32 128, %s195
        %p197 = scmp.lt.s32.totalorder %s192, 12
        %s198 = scalar_select %p197, %s192, 12
        %s199 = smul.addr %s198, 8
        %s200 = scalar_lea.vmem %s0, %s199
        %s201 = smul.u32 8, %s18
        %s202 = ssub.s32 13, %s201
        %p203 = scmp.lt.s32.totalorder %s202, 8
        %s204 = scalar_select %p203, %s202, 8
        %s205 = smul.u32 128, %s204
        %s206 = smul.u32 8, %s18
        %s207 = ssub.s32 13, %s206
        %p208 = scmp.lt.s32.totalorder %s207, 8
        %s209 = scalar_select %p208, %s207, 8
        %s210 = smul.u32 128, %s209
        %v212 = vld [vmem:[%s200] sm:$0xff]
        %v213 = vld [vmem:[%s200 + $0x8] sm:$0xff]
        %v214 = vld [vmem:[%s200 + $0x10] sm:$0xff]
        %v215 = vld [vmem:[%s200 + $0x18] sm:$0xff]
        %v216 = vld [vmem:[%s200 + $0x20] sm:$0xff]
        %v217 = vld [vmem:[%s200 + $0x28] sm:$0xff]
        %v218 = vld [vmem:[%s200 + $0x30] sm:$0xff]
        %v219 = vld [vmem:[%s200 + $0x38] sm:$0xff]
        %v220 = vpack.c.bf16 %v213, %v212
        %v221 = vpack.c.bf16 %v215, %v214
        %v222 = vpack.c.bf16 %v217, %v216
        %v223 = vpack.c.bf16 %v219, %v218
        %v224 = vld [vmem:[#allocation2] sm:$0xff]
        %v225 = vld [vmem:[#allocation2 + $0x8] sm:$0xff]
        %v226 = vld [vmem:[#allocation2 + $0x10] sm:$0xff]
        %v227 = vld [vmem:[#allocation2 + $0x18] sm:$0xff]
        %v232 = vunpack.c.l.b16 %v224
        %v233 = vunpack.c.h.b16 %v224
        %v234 = vunpack.c.l.b16 %v225
        %v235 = vunpack.c.h.b16 %v225
        %v236 = vunpack.c.l.b16 %v226
        %v237 = vunpack.c.h.b16 %v226
        %v238 = vunpack.c.l.b16 %v227
        %v239 = vunpack.c.h.b16 %v227
        %v240 = vpack.c.b16 %v234, %v232
        %v241 = vpack.c.b16 %v235, %v233
        %v242 = vpack.c.b16 %v238, %v236
        %v243 = vpack.c.b16 %v239, %v237
        %vm248 = vcmask 261120
        %v250 = vsel %vm248, %v220, 0
        %v253 = vsel %vm248, %v221, 0
        %v256 = vsel %vm248, %v222, 0
        %v259 = vsel %vm248, %v223, 0
        %261 = vmatprep.subr.bf16.mxu0 0
        %262 = vmatpush1.bf16.msra.mxu0 0
        %263 = vmatprep.subr.bf16.mxu0 0
        %264 = vmatpush1.bf16.msra.mxu0 0
        %265 = vmatprep.subr.bf16.mxu0 0
        %266 = vmatpush1.bf16.msra.mxu0 0
        %267 = vmatprep.subr.bf16.mxu0 0
        %268 = vmatpush1.bf16.msra.mxu0 0
        %269 = vmatprep.subr.bf16.mxu0 0
        %270 = vmatpush1.bf16.msra.mxu0 0
        %271 = vmatprep.subr.bf16.mxu0 0
        %272 = vmatpush1.bf16.msra.mxu0 0
        %273 = vmatprep.subr.bf16.mxu0 %v243
        %274 = vmatpush1.bf16.msra.mxu0 %v242
        %275 = vmatprep.subr.bf16.mxu0 %v241
        %276 = vmatpush1.bf16.msra.mxu0 %v240
        %277 = vmatprep.subr.bf16.mxu0 0
        %278 = vmatpush2.bf16.msra.mxu0 0
        %279 = vmatprep.subr.bf16.mxu0 0
        %280 = vmatpush2.bf16.msra.mxu0 0
        %281 = vmatprep.subr.bf16.mxu0 0
        %282 = vmatpush2.bf16.msra.mxu0 0
        %283 = vmatprep.subr.bf16.mxu0 0
        %284 = vmatpush2.bf16.msra.mxu0 0
        %285 = vmatprep.subr.bf16.mxu0 0
        %286 = vmatpush2.bf16.msra.mxu0 0
        %287 = vmatprep.subr.bf16.mxu0 0
        %288 = vmatpush2.bf16.msra.mxu0 0
        %289 = vmatprep.subr.bf16.mxu0 0
        %290 = vmatpush2.bf16.msra.mxu0 0
        %291 = vmatprep.subr.bf16.mxu0 0
        %292 = vmatpush2.bf16.msra.mxu0 0
        %293 = vmatprep.mubr.bf16.mxu0 0
        %294 = vmatmul.mubr.bf16.gmra.mxu0 %v250
        %v295 = vpop.f32.mrf.mxu0
        %v296 = vadd.f32 0.0, %v295
        %v297 = vpop.f32.mrf.mxu0
        %v298 = vadd.f32 0.0, %v297
        %v299 = vpop.f32.mrf.mxu0
        %v300 = vadd.f32 0.0, %v299
        %v301 = vpop.f32.mrf.mxu0
        %v302 = vadd.f32 0.0, %v301
        %303 = vmatprep.mubr.bf16.mxu0 0
        %304 = vmatmul.mubr.bf16.gmra.mxu0 %v253
        %v305 = vpop.f32.mrf.mxu0
        %v306 = vadd.f32 0.0, %v305
        %v307 = vpop.f32.mrf.mxu0
        %v308 = vadd.f32 0.0, %v307
        %v309 = vpop.f32.mrf.mxu0
        %v310 = vadd.f32 0.0, %v309
        %v311 = vpop.f32.mrf.mxu0
        %v312 = vadd.f32 0.0, %v311
        %313 = vmatprep.mubr.bf16.mxu0 0
        %314 = vmatmul.mubr.bf16.gmra.mxu0 %v256
        %v315 = vpop.f32.mrf.mxu0
        %v316 = vadd.f32 0.0, %v315
        %v317 = vpop.f32.mrf.mxu0
        %v318 = vadd.f32 0.0, %v317
        %v319 = vpop.f32.mrf.mxu0
        %v320 = vadd.f32 0.0, %v319
        %v321 = vpop.f32.mrf.mxu0
        %v322 = vadd.f32 0.0, %v321
        %323 = vmatprep.mubr.bf16.mxu0 0
        %324 = vmatmul.mubr.bf16.gmra.mxu0 %v259
        %v325 = vpop.f32.mrf.mxu0
        %v326 = vadd.f32 0.0, %v325
        %v327 = vpop.f32.mrf.mxu0
        %v328 = vadd.f32 0.0, %v327
        %v329 = vpop.f32.mrf.mxu0
        %v330 = vadd.f32 0.0, %v329
        %v331 = vpop.f32.mrf.mxu0
        %v332 = vadd.f32 0.0, %v331
        %333 = vdwg.mxu0
        %v334 = vmul.f32 %v296, 0.01
        %v335 = vmul.f32 %v298, 0.01
        %v336 = vmul.f32 %v300, 0.01
        %v337 = vmul.f32 %v302, 0.01
        %v338 = vmul.f32 %v306, 0.01
        %v339 = vmul.f32 %v308, 0.01
        %v340 = vmul.f32 %v310, 0.01
        %v341 = vmul.f32 %v312, 0.01
        %v342 = vmul.f32 %v316, 0.01
        %v343 = vmul.f32 %v318, 0.01
        %v344 = vmul.f32 %v320, 0.01
        %v345 = vmul.f32 %v322, 0.01
        %v346 = vmul.f32 %v326, 0.01
        %v347 = vmul.f32 %v328, 0.01
        %v348 = vmul.f32 %v330, 0.01
        %v349 = vmul.f32 %v332, 0.01
        %v350 = vmax.f32 %v296, %v334
        %v351 = vmax.f32 %v298, %v335
        %v352 = vmax.f32 %v300, %v336
        %v353 = vmax.f32 %v302, %v337
        %v354 = vmax.f32 %v306, %v338
        %v355 = vmax.f32 %v308, %v339
        %v356 = vmax.f32 %v310, %v340
        %v357 = vmax.f32 %v312, %v341
        %v358 = vmax.f32 %v316, %v342
        %v359 = vmax.f32 %v318, %v343
        %v360 = vmax.f32 %v320, %v344
        %v361 = vmax.f32 %v322, %v345
        %v362 = vmax.f32 %v326, %v346
        %v363 = vmax.f32 %v328, %v347
        %v364 = vmax.f32 %v330, %v348
        %v365 = vmax.f32 %v332, %v349
        %v366 = vpack.c.bf16 %v352, %v350
        %v367 = vpack.c.bf16 %v353, %v351
        %v368 = vpack.c.bf16 %v356, %v354
        %v369 = vpack.c.bf16 %v357, %v355
        %v370 = vpack.c.bf16 %v360, %v358
        %v371 = vpack.c.bf16 %v361, %v359
        %v372 = vpack.c.bf16 %v364, %v362
        %v373 = vpack.c.bf16 %v365, %v363
        %v374 = vld [vmem:[%s2] sm:$0xf]
        %v375 = vld [vmem:[%s2 + $0x4] sm:$0xf]
        %v376 = vld [vmem:[%s2 + $0x8] sm:$0xf]
        %v377 = vld [vmem:[%s2 + $0xc] sm:$0xf]
        %v378 = vld [vmem:[%s2 + $0x10] sm:$0xf]
        %v379 = vld [vmem:[%s2 + $0x14] sm:$0xf]
        %v380 = vld [vmem:[%s2 + $0x18] sm:$0xf]
        %v381 = vld [vmem:[%s2 + $0x1c] sm:$0xf]
        %v382 = vld [vmem:[%s2 + $0x20] sm:$0xf]
        %v383 = vld [vmem:[%s2 + $0x24] sm:$0xf]
        %v384 = vld [vmem:[%s2 + $0x28] sm:$0xf]
        %v385 = vld [vmem:[%s2 + $0x2c] sm:$0xf]
        %v386 = vld [vmem:[%s2 + $0x30] sm:$0xf]
        %v387 = vld [vmem:[%s2 + $0x34] sm:$0xf]
        %v388 = vld [vmem:[%s2 + $0x38] sm:$0xf]
        %v389 = vld [vmem:[%s2 + $0x3c] sm:$0xf]
        %v390 = vld [vmem:[%s2 + $0x40] sm:$0xf]
        %v391 = vld [vmem:[%s2 + $0x44] sm:$0xf]
        %v392 = vld [vmem:[%s2 + $0x48] sm:$0xf]
        %v393 = vld [vmem:[%s2 + $0x4c] sm:$0xf]
        %v394 = vld [vmem:[%s2 + $0x50] sm:$0xf]
        %v395 = vld [vmem:[%s2 + $0x54] sm:$0xf]
        %v396 = vld [vmem:[%s2 + $0x58] sm:$0xf]
        %v397 = vld [vmem:[%s2 + $0x5c] sm:$0xf]
        %v398 = vld [vmem:[%s2 + $0x60] sm:$0xf]
        %v399 = vld [vmem:[%s2 + $0x64] sm:$0xf]
        %v400 = vld [vmem:[%s2 + $0x68] sm:$0xf]
        %v401 = vld [vmem:[%s2 + $0x6c] sm:$0xf]
        %v402 = vld [vmem:[%s2 + $0x70] sm:$0xf]
        %v403 = vld [vmem:[%s2 + $0x74] sm:$0xf]
        %v404 = vld [vmem:[%s2 + $0x78] sm:$0xf]
        %v405 = vld [vmem:[%s2 + $0x7c] sm:$0xf]
        %v438 = vunpack.c.l.b16 %v374
        %v439 = vunpack.c.l.b16 %v375
        %v440 = vunpack.c.l.b16 %v376
        %v441 = vunpack.c.l.b16 %v377
        %v442 = vunpack.c.l.b16 %v378
        %v443 = vunpack.c.l.b16 %v379
        %v444 = vunpack.c.l.b16 %v380
        %v445 = vunpack.c.l.b16 %v381
        %v446 = vunpack.c.l.b16 %v382
        %v447 = vunpack.c.l.b16 %v383
        %v448 = vunpack.c.l.b16 %v384
        %v449 = vunpack.c.l.b16 %v385
        %v450 = vunpack.c.l.b16 %v386
        %v451 = vunpack.c.l.b16 %v387
        %v452 = vunpack.c.l.b16 %v388
        %v453 = vunpack.c.l.b16 %v389
        %v454 = vunpack.c.l.b16 %v390
        %v455 = vunpack.c.l.b16 %v391
        %v456 = vunpack.c.l.b16 %v392
        %v457 = vunpack.c.l.b16 %v393
        %v458 = vunpack.c.l.b16 %v394
        %v459 = vunpack.c.l.b16 %v395
        %v460 = vunpack.c.l.b16 %v396
        %v461 = vunpack.c.l.b16 %v397
        %v462 = vunpack.c.l.b16 %v398
        %v463 = vunpack.c.l.b16 %v399
        %v464 = vunpack.c.l.b16 %v400
        %v465 = vunpack.c.l.b16 %v401
        %v466 = vunpack.c.l.b16 %v402
        %v467 = vunpack.c.l.b16 %v403
        %v468 = vunpack.c.l.b16 %v404
        %v469 = vunpack.c.l.b16 %v405
        %v470 = vpack.c.b16 %v439, %v438
        %v471 = vpack.c.b16 %v441, %v440
        %v472 = vpack.c.b16 %v443, %v442
        %v473 = vpack.c.b16 %v445, %v444
        %v474 = vpack.c.b16 %v447, %v446
        %v475 = vpack.c.b16 %v449, %v448
        %v476 = vpack.c.b16 %v451, %v450
        %v477 = vpack.c.b16 %v453, %v452
        %v478 = vpack.c.b16 %v455, %v454
        %v479 = vpack.c.b16 %v457, %v456
        %v480 = vpack.c.b16 %v459, %v458
        %v481 = vpack.c.b16 %v461, %v460
        %v482 = vpack.c.b16 %v463, %v462
        %v483 = vpack.c.b16 %v465, %v464
        %v484 = vpack.c.b16 %v467, %v466
        %v485 = vpack.c.b16 %v469, %v468
        %502 = vmatprep.subr.bf16.mxu0 0
        %503 = vmatpush1.bf16.msra.mxu0 %v477
        %504 = vmatprep.subr.bf16.mxu0 0
        %505 = vmatpush1.bf16.msra.mxu0 %v476
        %506 = vmatprep.subr.bf16.mxu0 0
        %507 = vmatpush1.bf16.msra.mxu0 %v475
        %508 = vmatprep.subr.bf16.mxu0 0
        %509 = vmatpush1.bf16.msra.mxu0 %v474
        %510 = vmatprep.subr.bf16.mxu0 0
        %511 = vmatpush1.bf16.msra.mxu0 %v473
        %512 = vmatprep.subr.bf16.mxu0 0
        %513 = vmatpush1.bf16.msra.mxu0 %v472
        %514 = vmatprep.subr.bf16.mxu0 0
        %515 = vmatpush1.bf16.msra.mxu0 %v471
        %516 = vmatprep.subr.bf16.mxu0 0
        %517 = vmatpush1.bf16.msra.mxu0 %v470
        %518 = vmatprep.subr.bf16.mxu0 0
        %519 = vmatpush2.bf16.msra.mxu0 %v485
        %520 = vmatprep.subr.bf16.mxu0 0
        %521 = vmatpush2.bf16.msra.mxu0 %v484
        %522 = vmatprep.subr.bf16.mxu0 0
        %523 = vmatpush2.bf16.msra.mxu0 %v483
        %524 = vmatprep.subr.bf16.mxu0 0
        %525 = vmatpush2.bf16.msra.mxu0 %v482
        %526 = vmatprep.subr.bf16.mxu0 0
        %527 = vmatpush2.bf16.msra.mxu0 %v481
        %528 = vmatprep.subr.bf16.mxu0 0
        %529 = vmatpush2.bf16.msra.mxu0 %v480
        %530 = vmatprep.subr.bf16.mxu0 0
        %531 = vmatpush2.bf16.msra.mxu0 %v479
        %532 = vmatprep.subr.bf16.mxu0 0
        %533 = vmatpush2.bf16.msra.mxu0 %v478
        %534 = vmatprep.mubr.bf16.mxu0 %v367
        %535 = vmatmul.mubr.bf16.gmra.mxu0 %v366
        %v536 = vpop.f32.mrf.mxu0
        %v537 = vadd.f32 0.0, %v536
        %v538 = vpop.f32.mrf.mxu0
        %v539 = vpop.f32.mrf.mxu0
        %v540 = vadd.f32 0.0, %v539
        %v541 = vpop.f32.mrf.mxu0
        %542 = vmatprep.mubr.bf16.mxu0 %v369
        %543 = vmatmul.mubr.bf16.gmra.mxu0 %v368
        %v544 = vpop.f32.mrf.mxu0
        %v545 = vadd.f32 0.0, %v544
        %v546 = vpop.f32.mrf.mxu0
        %v547 = vpop.f32.mrf.mxu0
        %v548 = vadd.f32 0.0, %v547
        %v549 = vpop.f32.mrf.mxu0
        %550 = vmatprep.mubr.bf16.mxu0 %v371
        %551 = vmatmul.mubr.bf16.gmra.mxu0 %v370
        %v552 = vpop.f32.mrf.mxu0
        %v553 = vadd.f32 0.0, %v552
        %v554 = vpop.f32.mrf.mxu0
        %v555 = vpop.f32.mrf.mxu0
        %v556 = vadd.f32 0.0, %v555
        %v557 = vpop.f32.mrf.mxu0
        %558 = vmatprep.mubr.bf16.mxu0 %v373
        %559 = vmatmul.mubr.bf16.gmra.mxu0 %v372
        %v560 = vpop.f32.mrf.mxu0
        %v561 = vadd.f32 0.0, %v560
        %v562 = vpop.f32.mrf.mxu0
        %v563 = vpop.f32.mrf.mxu0
        %v564 = vadd.f32 0.0, %v563
        %v565 = vpop.f32.mrf.mxu0
        %566 = vdwg.mxu0
        %567 = vst [vmem:[%s191] sm:$0xff] %v537
        %568 = vst [vmem:[%s191 + $0x8] sm:$0xff] %v540
        %569 = vst [vmem:[%s191 + $0x10] sm:$0xff] %v545
        %570 = vst [vmem:[%s191 + $0x18] sm:$0xff] %v548
        %571 = vst [vmem:[%s191 + $0x20] sm:$0xff] %v553
        %572 = vst [vmem:[%s191 + $0x28] sm:$0xff] %v556
        %573 = vst [vmem:[%s191 + $0x30] sm:$0xff] %v561
        %574 = vst [vmem:[%s191 + $0x38] sm:$0xff] %v564
        %s575 = sand.u32 %s94, 1
        %s576 = scalar_lea.sflag [#allocation4], %s575
        %s577 = sand.u32 %s94, 1
        %s578 = smul.addr %s577, 64
        %s579 = scalar_lea.vmem [#allocation5], %s578
        // Predicated region
        $region37: #{tpu_custom_call.1} parent=31 // pred_check
          %p580 = pneg %p104
        $region38: #{tpu_custom_call.1} parent=31 // pred_check_branch
          %582 = sbr.rel (%p580) target = $region40
        $region39: #{tpu_custom_call.1} parent=31 // pred_region
          %s583 = smul.u32 8, %s18
          %s584 = ssub.s32 13, %s583
          %p585 = scmp.lt.s32.totalorder %s584, 8
          %s586 = scalar_select %p585, %s584, 8
          %s587 = smul.u32 128, %s586
          %s589 = ssub.s32 1024, %s587
          %590 = vsyncadd %s576, %s589
          %p591 = scmp.ne.s32.totalorder 0, %s587
          %s592 = smul.addr %s583, 128
          %s593 = scalar_lea.hbm %s3, %s592
          %s594 = smul.u32 8, %s586
          %s595 = sshll.u32 %s579, 4
          %s596 = int_to_ptr.vmem [resolvable:$true] %s595
          %s597 = sshll.u32 %s594, 4
          %601 = dma.vmem_to_hbm [thread:$0]  (%p591), %s596, %s597, %s593, %s576, 128, 128, 8
        $region40: #{tpu_custom_call.1} parent=31 // pred_fallthru
          _
      $region32: #{tpu_custom_call.1} parent=5 // pred_fallthru
        _
      %p602 = scmp.le.s32.totalorder 2, %s13
      // Predicated region
      $region41: #{tpu_custom_call.1} parent=5 // pred_check
        %p603 = pneg %p602
      $region42: #{tpu_custom_call.1} parent=5 // pred_check_branch
        %605 = sbr.rel (%p603) target = $region44
      $region43: #{tpu_custom_call.1} parent=5 // pred_region
        %s606 = ssub.s32 %s13, 2
        // Predicated region
        $region45: #{tpu_custom_call.1} parent=43 // pred_check
          %p607 = pneg %p110
        $region46: #{tpu_custom_call.1} parent=43 // pred_check_branch
          %609 = sbr.rel (%p607) target = $region48
        $region47: #{tpu_custom_call.1} parent=43 // pred_region
          %s610 = sand.u32 %s95, 1
          %s611 = scalar_lea.sflag [#allocation4], %s610
          %s612 = sand.u32 %s95, 1
          %s613 = smul.addr %s612, 64
          %s614 = scalar_lea.vmem [#allocation5], %s613
          %615 = dma.done %s611, 1024
        $region48: #{tpu_custom_call.1} parent=43 // pred_fallthru
          _
      $region44: #{tpu_custom_call.1} parent=5 // pred_fallthru
        _
    $region6: #{tpu_custom_call.1} parent=1 // loop_footer
      %s17 = sadd.s32 1, %s13
    $region7: #{tpu_custom_call.1} parent=1 // loop_footer_branch
      %12 = sbr.rel target = $region3
    $region8: #{tpu_custom_call.1} parent=1 // loop_exit
      _
    %616 = vsyncpa [#allocation3], 1
    %s617 = scalar_lea.sflag [#allocation3], 1
    %618 = vsyncpa %s617, 1
    %619 = vsyncpa [#allocation4], 1
    %s620 = scalar_lea.sflag [#allocation4], 1
    %621 = vsyncpa %s620, 1

</llo_original>
